<compile_context>
chip_gen: v6e
topology: v6e:2x2x1
jax: 0.10.0
libtpu: 0.0.40
codegen_flags: <defaults>
</compile_context>

<pallas_src>
import functools
import math

import jax
import jax.numpy as jnp
from jax import lax
from jax.experimental import pallas as pl
from jax.experimental.pallas import tpu as pltpu


# --------------------------------------------------------------------------- #
# Kernel
# --------------------------------------------------------------------------- #
def _resize_conv_kernel(p_ref, w_ref, b_ref, o_ref, acc_ref):
    """One (M-block, Cout-block) output tile; the reduction grid axis = KH taps.

    p_ref  : (t_nho, 1, Wo, KW*Cin)  activation tile (space-to-depth view), tap kh
    w_ref  : (KH, KW*Cin, tn)        full weight slab for this Cout block (resident)
    b_ref  : (1, tn)                 f32 bias tile
    o_ref  : (tm, tn)                output tile, tm = t_nho * Wo
    acc_ref: (tm, tn) f32            accumulator, resident across the kh sweep
    """
    kh = pl.program_id(2)
    tm, tn = acc_ref.shape
    t_nho, _, wo, kwc = p_ref.shape

    @pl.when(kh == 0)
    def _():
        # Bias folded into the accumulator init -> no epilogue add.
        acc_ref[...] = jnp.broadcast_to(b_ref[...], (tm, tn))

    # Collapse the (t_nho, 1, Wo) majors into the GEMM row axis (lane dim kept).
    p = p_ref[...].reshape(t_nho * wo, kwc)
    acc_ref[...] += jnp.dot(p, w_ref[kh], preferred_element_type=jnp.float32)

    @pl.when(kh == pl.num_programs(2) - 1)
    def _():
        o_ref[...] = acc_ref[...].astype(o_ref.dtype)


# --------------------------------------------------------------------------- #
# Helpers
# --------------------------------------------------------------------------- #
def compute_kernel_size(in_size, out_size, stride):
    # mirrors Conv2dResize.compute_kernel_size
    k0 = in_size[1] - (out_size[1] - 1) * stride[0]
    k1 = in_size[2] - (out_size[2] - 1) * stride[1]
    return [k0, k1]


def _round_up(x, m):
    return ((x + m - 1) // m) * m


def _cdiv(a, b):
    return (a + b - 1) // b


def _choose_row_block(nho, wo, target_rows):
    """Rows along the (N*Ho) axis per M-block so that (rows * wo) % 8 == 0."""
    p = 8 // math.gcd(wo, 8)                  # smallest t with (t*wo) % 8 == 0
    t_cap = min(nho, max(1, target_rows // max(wo, 1)))
    t = (t_cap // p) * p
    if t == 0:
        return nho                            # block == full dim (always legal)
    for c in range(t, 0, -p):                 # prefer a divisor of nho (no ragged tail)
        if nho % c == 0:
            return c
    return t


# --------------------------------------------------------------------------- #
# Wrapper
# --------------------------------------------------------------------------- #
@functools.partial(jax.jit, static_argnames=("stride", "gemm_dtype"))
def conv2d_resize_forward(x_nchw, weight_oihw, bias, stride,
                          gemm_dtype=jnp.bfloat16):
    """y = Conv2d(x; weight, bias, stride, padding=VALID). NCHW in / NCHW out."""
    N, Cin, H, W = x_nchw.shape
    Cout, Cin_w, KH, KW = weight_oihw.shape
    assert Cin == Cin_w
    SH, SW = stride
    Ho = (H - KH) // SH + 1
    Wo = (W - KW) // SW + 1

    NHo = N * Ho
    KWC = KW * Cin
    M = NHo * Wo                               # GEMM rows
    out_dtype = x_nchw.dtype

    # ---- activations: one layout pass (NCHW->NHWC fused with the bf16 cast);
    #      the im2col itself is a free contiguous reshape read via BlockSpec.
    x_nhwc = jnp.transpose(x_nchw, (0, 2, 3, 1)).astype(gemm_dtype)
    if KH == SH and KW == SW:
        # Conv2dResize case (H % Ho == 0): non-overlapping windows.
        x4 = x_nhwc.reshape(NHo, KH, Wo, KWC)  # pure view, no HBM copy
    else:
        # TODO(synk): overlapping-window fallback still materializes the taps in
        # HBM (duplicates activations by ~KH*KW/(SH*SW)); fold per-tap offsets
        # into the index_map if this path ever becomes hot.
        slabs = []
        for kh in range(KH):
            taps = [x_nhwc[:, kh:kh + (Ho - 1) * SH + 1:SH,
                              kw:kw + (Wo - 1) * SW + 1:SW, :]
                    for kw in range(KW)]       # each (N, Ho, Wo, Cin)
            slabs.append(jnp.stack(taps, axis=3).reshape(N, Ho, Wo, KWC))
        x4 = jnp.stack(slabs, axis=2).reshape(NHo, KH, Wo, KWC)

    # ---- Cout tiling (lane-dense output, multiple of 128)
    Cp = _round_up(Cout, 128)
    tn = Cp if Cp <= 512 else 512
    Cp = _round_up(Cp, tn)

    # ---- weights: (Cout,Cin,KH,KW) -> (KH, KW*Cin, Cp); tap-major so the kernel
    #      slices one tap per reduction step.  Only weight/bias (tiny) get padded.
    w3 = jnp.transpose(weight_oihw, (2, 3, 1, 0)).reshape(KH, KWC, Cout)
    w3 = jnp.pad(w3, ((0, 0), (0, 0), (0, Cp - Cout))).astype(gemm_dtype)
    b2 = jnp.pad(bias.astype(jnp.float32).reshape(1, Cout),
                 ((0, 0), (0, Cp - Cout)))

    # ---- M tiling (rows per block multiple of 8, ~512 GEMM rows target)
    elem = jnp.dtype(gemm_dtype).itemsize
    out_elem = jnp.dtype(out_dtype).itemsize
    p_align = 8 // math.gcd(Wo, 8)
    t_nho = _choose_row_block(NHo, Wo, target_rows=512)

    def vmem_bytes(t):
        tm_ = t * Wo
        return (2 * t * Wo * KWC * elem        # double-buffered activation tile
                + 2 * KH * KWC * tn * elem     # resident weight slab
                + 2 * tn * 4                   # bias
                + 2 * tm_ * tn * out_elem      # output tile
                + tm_ * tn * 4)                # f32 accumulator

    budget = 40 * 2 ** 20                      # fits v7x's 64 MiB VMEM comfortably
    while vmem_bytes(t_nho) > budget and t_nho > p_align:
        t_nho = max(p_align, ((t_nho // 2) // p_align) * p_align)

    grid_m = _cdiv(NHo, t_nho)
    grid_j = Cp // tn
    # v7x shards the "parallel" axes over 2 TensorCores: ensure >= 2 parallel
    # blocks when there is enough work.
    if grid_m * grid_j < 2 and t_nho >= 2 * p_align and M >= 256:
        t_nho = max(p_align, ((t_nho // 2) // p_align) * p_align)
        grid_m = _cdiv(NHo, t_nho)

    tm = t_nho * Wo

    cost = pl.CostEstimate(
        flops=2 * M * KH * KWC * Cp,
        transcendentals=0,
        bytes_accessed=(grid_j * NHo * KH * Wo * KWC * elem   # activations
                        + KH * KWC * Cp * elem                # resident weights
                        + Cp * 4                              # bias
                        + M * Cp * out_elem),                 # output
    )

    out2d = pl.pallas_call(
        _resize_conv_kernel,
        out_shape=jax.ShapeDtypeStruct((M, Cp), out_dtype),
        grid_spec=pltpu.PrefetchScalarGridSpec(
            num_scalar_prefetch=0,
            grid=(grid_m, grid_j, KH),
            in_specs=[
                # activation tile: tap kh of M-block i (space-to-depth view)
                pl.BlockSpec((t_nho, 1, Wo, KWC), lambda i, j, kh: (i, kh, 0, 0)),
                # weight slab: resident across the whole M sweep for this j
                pl.BlockSpec((KH, KWC, tn), lambda i, j, kh: (0, 0, j)),
                pl.BlockSpec((1, tn), lambda i, j, kh: (0, j)),
            ],
            out_specs=pl.BlockSpec((tm, tn), lambda i, j, kh: (i, j)),
            scratch_shapes=[pltpu.VMEM((tm, tn), jnp.float32)],
        ),
        compiler_params=pltpu.CompilerParams(
            dimension_semantics=("parallel", "parallel", "arbitrary"),
            vmem_limit_bytes=int(min(44 * 2 ** 20,
                                     max(32 * 2 ** 20, 2 * vmem_bytes(t_nho)))),
        ),
        cost_estimate=cost,
    )(x4, w3, b2)

    out = out2d[:, :Cout].reshape(N, Ho, Wo, Cout)
    # TODO(synk): NHWC-accepting consumers can skip this final transpose (one
    # extra XLA pass over the small output); NCHW kept to match nn.Conv2d.
    return jnp.transpose(out, (0, 3, 1, 2))


# --------------------------------------------------------------------------- #
# Reference + test
# --------------------------------------------------------------------------- #
def _ref_conv(x, w, b, stride):
    out = lax.conv_general_dilated(
        x, w, window_strides=tuple(stride), padding="VALID",
        dimension_numbers=("NCHW", "OIHW", "NCHW"))
    return out + b[None, :, None, None]


if __name__ == "__main__":
    # Module constructor args (small): in_size=(Cin,H,W), out_size=(Cout,Ho,Wo)
    in_size = (4, 16, 16)
    out_size = (8, 4, 4)
    N = 2

    stride = (in_size[1] // out_size[1], in_size[2] // out_size[2])   # (4, 4)
    ksize = compute_kernel_size(in_size, out_size, stride)            # [4, 4]
    Cout, Cin, KH, KW = out_size[0], in_size[0], ksize[0], ksize[1]

    key = jax.random.PRNGKey(0)
    kx, kb, kw2 = jax.random.split(key, 3)

    x = jax.random.normal(kx, (N, Cin, in_size[1], in_size[2]), jnp.float32)

    # Per Conv2dResize.__init__: conv weight is zero-initialized; bias keeps
    # PyTorch's default Conv2d init (uniform +/- 1/sqrt(fan_in)), deterministic here.
    fan_in = Cin * KH * KW
    bound = 1.0 / math.sqrt(fan_in)
    weight0 = jnp.zeros((Cout, Cin, KH, KW), jnp.float32)
    bias = jax.random.uniform(kb, (Cout,), jnp.float32, -bound, bound)

    # 1) Module forward (zero weights -> output equals broadcast bias), bf16 default.
    y = jax.block_until_ready(conv2d_resize_forward(x, weight0, bias, stride))
    assert y.shape == (N, out_size[0], out_size[1], out_size[2])
    assert jnp.allclose(y, _ref_conv(x, weight0, bias, stride), atol=1e-6)

    # 2) Non-zero weights, f32 MXU operands: tight tolerance vs XLA conv.
    w_rand = 0.05 * jax.random.normal(kw2, (Cout, Cin, KH, KW), jnp.float32)
    y2 = jax.block_until_ready(
        conv2d_resize_forward(x, w_rand, bias, stride, gemm_dtype=jnp.float32))
    assert jnp.allclose(y2, _ref_conv(x, w_rand, bias, stride), atol=1e-4, rtol=1e-4)

    # 3) Default bf16 MXU path (f32 accumulation) -> loose tolerance.
    y3 = jax.block_until_ready(conv2d_resize_forward(x, w_rand, bias, stride))
    assert jnp.allclose(y3, _ref_conv(x, w_rand, bias, stride), atol=5e-2, rtol=5e-2)

    # 4) General (overlapping-window) fallback path, f32 operands.
    in_size2, out_size2 = (4, 10, 10), (8, 4, 4)
    stride2 = (in_size2[1] // out_size2[1], in_size2[2] // out_size2[2])  # (2, 2)
    k2 = compute_kernel_size(in_size2, out_size2, stride2)               # [4, 4]
    x2 = jax.random.normal(kx, (N, in_size2[0], in_size2[1], in_size2[2]),
                           jnp.float32)
    w2 = 0.05 * jax.random.normal(
        kw2, (out_size2[0], in_size2[0], k2[0], k2[1]), jnp.float32)
    y4 = jax.block_until_ready(
        conv2d_resize_forward(x2, w2, bias, tuple(stride2), gemm_dtype=jnp.float32))
    assert jnp.allclose(y4, _ref_conv(x2, w2, bias, stride2), atol=1e-4, rtol=1e-4)

    print("KERNEL_OK")
</pallas_src>

<mosaic_0001>
module attributes {stable_mosaic.version = 11 : i64} {
  func.func @_resize_conv_kernel(%arg0: i32, %arg1: i32, %arg2: i32, %arg3: memref<8x1x4x16xbf16, #tpu.memory_space<vmem>>, %arg4: memref<4x16x128xbf16, #tpu.memory_space<vmem>>, %arg5: memref<1x128xf32, #tpu.memory_space<vmem>>, %arg6: memref<32x128xf32, #tpu.memory_space<vmem>>, %arg7: memref<32x128xf32, #tpu.memory_space<vmem>>) attributes {dimension_semantics = [#tpu.dimension_semantics<parallel>, #tpu.dimension_semantics<parallel>, #tpu.dimension_semantics<arbitrary>], iteration_bounds = array<i64: 1, 1, 4>, scalar_prefetch = 0 : i64, scratch_operands = 1 : i64, tpu.core_type = #tpu.core_type<tc>, window_params = [{transform_indices = @transform_0, window_bounds = array<i64: 8, 1, 4, 16>}, {transform_indices = @transform_1, window_bounds = array<i64: 4, 16, 128>}, {transform_indices = @transform_2, window_bounds = array<i64: 1, 128>}, {transform_indices = @transform_3, window_bounds = array<i64: 32, 128>}]} {
    %c0_i32 = arith.constant 0 : i32
    %0 = arith.cmpi eq, %arg2, %c0_i32 : i32
    %1 = arith.extui %0 : i1 to i32
    %c0_i32_0 = arith.constant 0 : i32
    %2 = arith.cmpi ne, %1, %c0_i32_0 : i32
    scf.if %2 {
      %c0_11 = arith.constant 0 : index
      %c0_12 = arith.constant 0 : index
      %15 = vector.load %arg5[%c0_11, %c0_12] : memref<1x128xf32, #tpu.memory_space<vmem>>, vector<1x128xf32>
      %16 = vector.shape_cast %15 : vector<1x128xf32> to vector<1x128xf32>
      %17 = vector.broadcast %16 : vector<1x128xf32> to vector<32x128xf32>
      %c0_13 = arith.constant 0 : index
      %c0_14 = arith.constant 0 : index
      %18 = vector.load %arg7[%c0_13, %c0_14] : memref<32x128xf32, #tpu.memory_space<vmem>>, vector<32x128xf32>
      tpu.vector_store %arg7[%c0_13, %c0_14], %17 {strides = array<i32>} : memref<32x128xf32, #tpu.memory_space<vmem>>, vector<32x128xf32>,
    } else {
    }
    %c0 = arith.constant 0 : index
    %c0_1 = arith.constant 0 : index
    %c0_2 = arith.constant 0 : index
    %c0_3 = arith.constant 0 : index
    %3 = vector.load %arg3[%c0, %c0_1, %c0_2, %c0_3] : memref<8x1x4x16xbf16, #tpu.memory_space<vmem>>, vector<8x1x4x16xbf16>
    %4 = vector.shape_cast %3 : vector<8x1x4x16xbf16> to vector<32x16xbf16>
    %c0_4 = arith.constant 0 : index
    %c0_5 = arith.constant 0 : index
    %5 = vector.load %arg7[%c0_4, %c0_5] : memref<32x128xf32, #tpu.memory_space<vmem>>, vector<32x128xf32>
    %6 = arith.index_cast %arg2 : i32 to index
    %c0_6 = arith.constant 0 : index
    %c0_7 = arith.constant 0 : index
    %7 = vector.load %arg4[%6, %c0_6, %c0_7] : memref<4x16x128xbf16, #tpu.memory_space<vmem>>, vector<1x16x128xbf16>
    %8 = vector.shape_cast %7 : vector<1x16x128xbf16> to vector<16x128xbf16>
    %cst = arith.constant dense<0.000000e+00> : vector<32x128xf32>
    %9 = tpu.matmul %4, %8, %cst {dimension_numbers = #tpu.dot_dimension_numbers<[1], [0], [0], [1], [0, 0, 1, 1], [], []>} : vector<32x16xbf16>, vector<16x128xbf16>, vector<32x128xf32> -> vector<32x128xf32>
    %10 = arith.addf %5, %9 : vector<32x128xf32>
    %c0_8 = arith.constant 0 : index
    %c0_9 = arith.constant 0 : index
    %11 = vector.load %arg7[%c0_8, %c0_9] : memref<32x128xf32, #tpu.memory_space<vmem>>, vector<32x128xf32>
    tpu.vector_store %arg7[%c0_8, %c0_9], %10 {strides = array<i32>} : memref<32x128xf32, #tpu.memory_space<vmem>>, vector<32x128xf32>,
    %c3_i32 = arith.constant 3 : i32
    %12 = arith.cmpi eq, %arg2, %c3_i32 : i32
    %13 = arith.extui %12 : i1 to i32
    %c0_i32_10 = arith.constant 0 : i32
    %14 = arith.cmpi ne, %13, %c0_i32_10 : i32
    scf.if %14 {
      %c0_11 = arith.constant 0 : index
      %c0_12 = arith.constant 0 : index
      %15 = vector.load %arg7[%c0_11, %c0_12] : memref<32x128xf32, #tpu.memory_space<vmem>>, vector<32x128xf32>
      %c0_13 = arith.constant 0 : index
      %c0_14 = arith.constant 0 : index
      %16 = vector.load %arg6[%c0_13, %c0_14] : memref<32x128xf32, #tpu.memory_space<vmem>>, vector<32x128xf32>
      tpu.vector_store %arg6[%c0_13, %c0_14], %15 {strides = array<i32>} : memref<32x128xf32, #tpu.memory_space<vmem>>, vector<32x128xf32>,
    } else {
    }
    return
  }
  func.func @transform_0(%arg0: i32, %arg1: i32, %arg2: i32) -> (i32, i32, i32, i32) {
    %c0_i32 = arith.constant 0 : i32
    %c0_i32_0 = arith.constant 0 : i32
    %c0_i32_1 = arith.constant 0 : i32
    return %arg0, %arg2, %c0_i32, %c0_i32_0 : i32, i32, i32, i32
  }
  func.func @transform_1(%arg0: i32, %arg1: i32, %arg2: i32) -> (i32, i32, i32) {
    %c0_i32 = arith.constant 0 : i32
    %c0_i32_0 = arith.constant 0 : i32
    %c0_i32_1 = arith.constant 0 : i32
    return %c0_i32, %c0_i32_0, %arg1 : i32, i32, i32
  }
  func.func @transform_2(%arg0: i32, %arg1: i32, %arg2: i32) -> (i32, i32) {
    %c0_i32 = arith.constant 0 : i32
    %c0_i32_0 = arith.constant 0 : i32
    return %c0_i32, %arg1 : i32, i32
  }
  func.func @transform_3(%arg0: i32, %arg1: i32, %arg2: i32) -> (i32, i32) {
    %c0_i32 = arith.constant 0 : i32
    return %arg0, %arg1 : i32, i32
  }
}

</mosaic_0001>

<llo_original>
// kernel: conv2d_resize_forward.1
$region0: #{conv2d_resize_forward.1}
  #allocation0 [shape = 'u32[]', space=smem, size = 0x4, offset = 0x4, fixed_abs, tag = 'smem constant byte address 0x4 - core index']
  #allocation1 [shape = 'u32[144,128]{1,0:T(1,128)}', space=vmem, size = 0x12000, scoped, tag = 'internal scratch']
  #allocation2 [shape = 'f32[32,128]{1,0:T(8,128)}', space=vmem, size = 0x4000, scoped, tag = 'scratch operand']
  %s0 = inlined_call_operand.vmem [shape: bf16[8,4,4,16], index: 0, kind: input, shape index: {}]
  %s1 = inlined_call_operand.vmem [shape: bf16[4,16,128], index: 1, kind: input, shape index: {}]
  %s2 = inlined_call_operand.vmem [shape: f32[1,128], index: 2, kind: input, shape index: {}]
  %s3 = inlined_call_operand.hbm [shape: f32[32,128], index: 3, kind: output, shape index: {}]
  %s4 = sld [smem:[#allocation0]]
  $region94: #{conv2d_resize_forward.1} parent=0
    _
  %s6 = ssub.s32 1, %s4
  %s7 = scalar_select 0, %s6, %s4
  $region1: #{conv2d_resize_forward.1} parent=0
    #allocation3 [shape = 'u8[16384]{0}', space=vmem, size = 0x4000, scoped, tag = 'input window, operand 0']
    #allocation4 [shape = 'u8[16384]{0}', space=vmem, size = 0x4000, scoped, tag = 'output window, operand 0, single buffered']
    #allocation5 [shape = 's32[2]{0}', space=sflag, size = 0x8, scoped, tag = 'scoped memory for conv2d_resize_forward.1']
    %8 = vsyncpa [#allocation5], 0
    loop: start=0, step=1, limit=6
    $region2: #{conv2d_resize_forward.1} parent=1 // loop_pre_header
      _
    $region3: #{conv2d_resize_forward.1} parent=1 // loop_header
      %s10 = sphi 0, %s14
      %p11 = scmp.ge.s32.totalorder %s10, 6
      %s17 = sphi 0, %s36
      %s18 = sphi 0, %s32
      %s19 = sphi 0, %s28
      %s20 = sphi 0, %s17
      %s21 = sphi 0, %s18
      %s22 = sphi 0, %s19
      %s23 = sphi 0, %s20
      %s24 = sphi 0, %s21
      %s25 = sphi 0, %s22
      %s41 = sphi 0, %s43
      %s44 = sphi 0, %s41
      %s45 = sphi 0, %s44
      %s61 = sphi 0, %s45
      %s67 = sphi 0, %s69
      %s70 = sphi 0, %s67
      %s71 = sphi 0, %s70
      %s87 = sphi 0, %s71
      %s93 = sphi 0, %s95
      %s96 = sphi 0, %s93
      %s97 = sphi 0, %s96
      %s113 = sphi 0, %s97
      %s121 = sphi 0, %s123
      %s124 = sphi 0, %s121
      %s125 = sphi 0, %s124
      %s141 = sphi 0, %s125
    $region4: #{conv2d_resize_forward.1} parent=1 // loop_header_branch
      %13 = sbr.rel (%p11) target = $region8
    $region5: #{conv2d_resize_forward.1} parent=1 // loop_body
      %s15 = ssub.s32 %s10, 1
      %s16 = ssub.s32 %s10, 2
      %s26 = sadd.s32 1, %s19
      %p27 = scmp.ge.s32.totalorder %s26, 4
      %s28 = scalar_select %p27, 0, %s26
      %s29 = sadd.s32 1, %s18
      %s30 = scalar_select %p27, %s29, %s18
      %p31 = scmp.ge.s32.totalorder %s30, 1
      %s32 = scalar_select %p31, 0, %s30
      %s33 = sadd.s32 1, %s17
      %s34 = scalar_select %p31, %s33, %s17
      %p35 = scmp.ge.s32.totalorder %s34, 1
      %s36 = scalar_select %p35, 0, %s34
      %s37 = ssub.s32 %s17, %s36
      %s38 = ssub.s32 %s19, %s28
      %s39 = sor.u32 %s37, %s38
      %p40 = scmp.eq.s32.totalorder %s39, 0
      %s42 = sadd.s32 %s41, 1
      %s43 = scalar_select %p40, %s41, %s42
      %p46 = pneg %p40
      %p47 = scmp.eq.s32.totalorder %s10, 3
      %p48 = por %p46, %p47
      %p49 = scmp.ne.s32.totalorder %s41, %s44
      %p50 = scmp.eq.s32.totalorder %s10, 0
      %p51 = por %p49, %p50
      %p52 = scmp.ne.s32.totalorder %s41, %s44
      %p53 = scmp.eq.s32.totalorder %s15, 3
      %p54 = por %p52, %p53
      %p55 = scmp.ne.s32.totalorder %s44, %s45
      %p56 = scmp.eq.s32.totalorder %s15, 0
      %p57 = por %p55, %p56
      %p58 = scmp.ne.s32.totalorder %s44, %s45
      %p59 = scmp.eq.s32.totalorder %s16, 3
      %p60 = por %p58, %p59
      %p62 = scmp.ne.s32.totalorder %s45, %s61
      %p63 = scmp.eq.s32.totalorder %s16, 0
      %p64 = por %p62, %p63
      %s65 = ssub.s32 %s18, %s32
      %p66 = scmp.eq.s32.totalorder %s65, 0
      %s68 = sadd.s32 %s67, 1
      %s69 = scalar_select %p66, %s67, %s68
      %p72 = pneg %p66
      %p73 = scmp.eq.s32.totalorder %s10, 3
      %p74 = por %p72, %p73
      %p75 = scmp.ne.s32.totalorder %s67, %s70
      %p76 = scmp.eq.s32.totalorder %s10, 0
      %p77 = por %p75, %p76
      %p78 = scmp.ne.s32.totalorder %s67, %s70
      %p79 = scmp.eq.s32.totalorder %s15, 3
      %p80 = por %p78, %p79
      %p81 = scmp.ne.s32.totalorder %s70, %s71
      %p82 = scmp.eq.s32.totalorder %s15, 0
      %p83 = por %p81, %p82
      %p84 = scmp.ne.s32.totalorder %s70, %s71
      %p85 = scmp.eq.s32.totalorder %s16, 3
      %p86 = por %p84, %p85
      %p88 = scmp.ne.s32.totalorder %s71, %s87
      %p89 = scmp.eq.s32.totalorder %s16, 0
      %p90 = por %p88, %p89
      %s91 = ssub.s32 %s18, %s32
      %p92 = scmp.eq.s32.totalorder %s91, 0
      %s94 = sadd.s32 %s93, 1
      %s95 = scalar_select %p92, %s93, %s94
      %p98 = pneg %p92
      %p99 = scmp.eq.s32.totalorder %s10, 3
      %p100 = por %p98, %p99
      %p101 = scmp.ne.s32.totalorder %s93, %s96
      %p102 = scmp.eq.s32.totalorder %s10, 0
      %p103 = por %p101, %p102
      %p104 = scmp.ne.s32.totalorder %s93, %s96
      %p105 = scmp.eq.s32.totalorder %s15, 3
      %p106 = por %p104, %p105
      %p107 = scmp.ne.s32.totalorder %s96, %s97
      %p108 = scmp.eq.s32.totalorder %s15, 0
      %p109 = por %p107, %p108
      %p110 = scmp.ne.s32.totalorder %s96, %s97
      %p111 = scmp.eq.s32.totalorder %s16, 3
      %p112 = por %p110, %p111
      %p114 = scmp.ne.s32.totalorder %s97, %s113
      %p115 = scmp.eq.s32.totalorder %s16, 0
      %p116 = por %p114, %p115
      %s117 = ssub.s32 %s17, %s36
      %s118 = ssub.s32 %s18, %s32
      %s119 = sor.u32 %s117, %s118
      %p120 = scmp.eq.s32.totalorder %s119, 0
      %s122 = sadd.s32 %s121, 1
      %s123 = scalar_select %p120, %s121, %s122
      %p126 = pneg %p120
      %p127 = scmp.eq.s32.totalorder %s10, 3
      %p128 = por %p126, %p127
      %p129 = scmp.ne.s32.totalorder %s121, %s124
      %p130 = scmp.eq.s32.totalorder %s10, 0
      %p131 = por %p129, %p130
      %p132 = scmp.ne.s32.totalorder %s121, %s124
      %p133 = scmp.eq.s32.totalorder %s15, 3
      %p134 = por %p132, %p133
      %p135 = scmp.ne.s32.totalorder %s124, %s125
      %p136 = scmp.eq.s32.totalorder %s15, 0
      %p137 = por %p135, %p136
      %p138 = scmp.ne.s32.totalorder %s124, %s125
      %p139 = scmp.eq.s32.totalorder %s16, 3
      %p140 = por %p138, %p139
      %p142 = scmp.ne.s32.totalorder %s125, %s141
      %p143 = scmp.eq.s32.totalorder %s16, 0
      %p144 = por %p142, %p143
      %p145 = scmp.le.s32.totalorder 1, %s10
      %p146 = scmp.lt.s32.totalorder %s10, 5
      %p147 = pnand %p145, %p146
      %p148 = pneg %p147
      // Predicated region
      $region9: #{conv2d_resize_forward.1} parent=5 // pred_check
        _
      $region10: #{conv2d_resize_forward.1} parent=5 // pred_check_branch
        %150 = sbr.rel (%p147) target = $region12
      $region11: #{conv2d_resize_forward.1} parent=5 // pred_region
        %s151 = ssub.s32 %s10, 1
        // Predicated region
        $region13: #{conv2d_resize_forward.1} parent=11 // pred_check
          %p152 = pneg %p83
        $region14: #{conv2d_resize_forward.1} parent=11 // pred_check_branch
          %154 = sbr.rel (%p152) target = $region16
        $region15: #{conv2d_resize_forward.1} parent=11 // pred_region
          %p155 = scmp.lt.s32.totalorder %s21, 0
          %s156 = scalar_select %p155, %s21, 0
          %s157 = smul.addr %s156, 4
          %s158 = scalar_lea.vmem %s1, %s157
        $region16: #{conv2d_resize_forward.1} parent=11 // pred_fallthru
          _
        // Predicated region
        $region17: #{conv2d_resize_forward.1} parent=11 // pred_check
          %p159 = pneg %p109
        $region18: #{conv2d_resize_forward.1} parent=11 // pred_check_branch
          %161 = sbr.rel (%p159) target = $region20
        $region19: #{conv2d_resize_forward.1} parent=11 // pred_region
          %p162 = scmp.lt.s32.totalorder %s21, 0
          %s163 = scalar_select %p162, %s21, 0
          %s164 = scalar_lea.vmem %s2, %s163
        $region20: #{conv2d_resize_forward.1} parent=11 // pred_fallthru
          _
      $region12: #{conv2d_resize_forward.1} parent=5 // pred_fallthru
        _
      %p165 = scmp.lt.s32.totalorder %s10, 4
      // Predicated region
      $region21: #{conv2d_resize_forward.1} parent=5 // pred_check
        %p166 = pneg %p165
      $region22: #{conv2d_resize_forward.1} parent=5 // pred_check_branch
        %168 = sbr.rel (%p166) target = $region24
      $region23: #{conv2d_resize_forward.1} parent=5 // pred_region
        // Predicated region
        $region25: #{conv2d_resize_forward.1} parent=23 // pred_check
          %p169 = pneg %p51
        $region26: #{conv2d_resize_forward.1} parent=23 // pred_check_branch
          %171 = sbr.rel (%p169) target = $region28
        $region27: #{conv2d_resize_forward.1} parent=23 // pred_region
          %s172 = sand.u32 %s41, 1
          %s173 = sand.u32 %s41, 1
          %s174 = smul.addr %s173, 16
          %s175 = scalar_lea.vmem [#allocation3], %s174
          %s176 = smul.u32 8, %s17
          %s177 = smul.addr %s176, 4
          %s178 = sadd.s32 %s19, %s177
          %s179 = smul.addr %s178, 2
          %s180 = scalar_lea.vmem %s0, %s179
          // Predicated region
          $region29: #{conv2d_resize_forward.1} parent=27 // pred_check
            _
          $region30: #{conv2d_resize_forward.1} parent=27 // pred_check_branch
            %182 = sbr.rel (0) target = $region32
          $region31: #{conv2d_resize_forward.1} parent=27 // pred_region
            // Predicated region
            $region33: #{conv2d_resize_forward.1} parent=31 // pred_check
              _
            $region34: #{conv2d_resize_forward.1} parent=31 // pred_check_branch
              %184 = sbr.rel target = $region36
            $region35: #{conv2d_resize_forward.1} parent=31 // pred_region
              // Predicated region
              $region48: #{conv2d_resize_forward.1} parent=35 // pred_check
                _
              $region49: #{conv2d_resize_forward.1} parent=35 // pred_check_branch
                %214 = sbr.rel (0) target = $region51
              $region50: #{conv2d_resize_forward.1} parent=35 // pred_region
                loop: start=0, step=1, limit=1
                $region52: #{conv2d_resize_forward.1} parent=50 // loop_pre_header
                  _
                $region53: #{conv2d_resize_forward.1} parent=50 // loop_header
                  %s216 = sphi 0, %s220
                  %p217 = scmp.ge.s32.totalorder %s216, 1
                  %s221 = sphi %s180, %s180
                  %s222 = sphi %s175, %s175
                $region54: #{conv2d_resize_forward.1} parent=50 // loop_header_branch
                  %219 = sbr.rel (%p217) target = $region58
                $region55: #{conv2d_resize_forward.1} parent=50 // loop_body
                  _
                $region56: #{conv2d_resize_forward.1} parent=50 // loop_footer
                  %s220 = sadd.s32 1, %s216
                $region57: #{conv2d_resize_forward.1} parent=50 // loop_footer_branch
                  %215 = sbr.rel target = $region53
                $region58: #{conv2d_resize_forward.1} parent=50 // loop_exit
                  _
                %s224 = ssub.s32 4, 1
                loop: start=0, step=1, limit=1
                $region59: #{conv2d_resize_forward.1} parent=50 // loop_pre_header
                  _
                $region60: #{conv2d_resize_forward.1} parent=50 // loop_header
                  %s226 = sphi 0, %s230
                  %p227 = scmp.ge.s32.totalorder %s226, 1
                  %s231 = sphi %s180, %s180
                  %s232 = sphi %s175, %s175
                $region61: #{conv2d_resize_forward.1} parent=50 // loop_header_branch
                  %229 = sbr.rel (%p227) target = $region65
                $region62: #{conv2d_resize_forward.1} parent=50 // loop_body
                  %v233 = vld [vmem:[%s231] sm:%s224]
                  %234 = vst [vmem:[%s232] sm:%s224] %v233
                  %v235 = vld [vmem:[%s231 + $0x8] sm:%s224]
                  %236 = vst [vmem:[%s232 + $0x2] sm:%s224] %v235
                  %v237 = vld [vmem:[%s231 + $0x10] sm:%s224]
                  %238 = vst [vmem:[%s232 + $0x4] sm:%s224] %v237
                  %v239 = vld [vmem:[%s231 + $0x18] sm:%s224]
                  %240 = vst [vmem:[%s232 + $0x6] sm:%s224] %v239
                  %v241 = vld [vmem:[%s231 + $0x20] sm:%s224]
                  %242 = vst [vmem:[%s232 + $0x8] sm:%s224] %v241
                  %v243 = vld [vmem:[%s231 + $0x28] sm:%s224]
                  %244 = vst [vmem:[%s232 + $0xa] sm:%s224] %v243
                  %v245 = vld [vmem:[%s231 + $0x30] sm:%s224]
                  %246 = vst [vmem:[%s232 + $0xc] sm:%s224] %v245
                  %v247 = vld [vmem:[%s231 + $0x38] sm:%s224]
                  %248 = vst [vmem:[%s232 + $0xe] sm:%s224] %v247
                $region63: #{conv2d_resize_forward.1} parent=50 // loop_footer
                  %s230 = sadd.s32 1, %s226
                $region64: #{conv2d_resize_forward.1} parent=50 // loop_footer_branch
                  %225 = sbr.rel target = $region60
                $region65: #{conv2d_resize_forward.1} parent=50 // loop_exit
                  _
              $region51: #{conv2d_resize_forward.1} parent=35 // pred_fallthru
                _
            $region36: #{conv2d_resize_forward.1} parent=31 // pred_fallthru
              _
            // Predicated region
            $region37: #{conv2d_resize_forward.1} parent=31 // pred_check
              _
            $region38: #{conv2d_resize_forward.1} parent=31 // pred_check_branch
              %186 = sbr.rel (0) target = $region40
            $region39: #{conv2d_resize_forward.1} parent=31 // pred_region
              %s188 = ssub.s32 4, 1
              loop: start=0, step=1, limit=1
              $region41: #{conv2d_resize_forward.1} parent=39 // loop_pre_header
                _
              $region42: #{conv2d_resize_forward.1} parent=39 // loop_header
                %s190 = sphi 0, %s194
                %p191 = scmp.ge.s32.totalorder %s190, 1
                %s195 = sphi %s180, %s180
                %s196 = sphi %s175, %s175
              $region43: #{conv2d_resize_forward.1} parent=39 // loop_header_branch
                %193 = sbr.rel (%p191) target = $region47
              $region44: #{conv2d_resize_forward.1} parent=39 // loop_body
                %v197 = vld [vmem:[%s195] sm:%s188]
                %198 = vst [vmem:[%s196] sm:%s188] %v197
                %v199 = vld [vmem:[%s195 + $0x8] sm:%s188]
                %200 = vst [vmem:[%s196 + $0x2] sm:%s188] %v199
                %v201 = vld [vmem:[%s195 + $0x10] sm:%s188]
                %202 = vst [vmem:[%s196 + $0x4] sm:%s188] %v201
                %v203 = vld [vmem:[%s195 + $0x18] sm:%s188]
                %204 = vst [vmem:[%s196 + $0x6] sm:%s188] %v203
                %v205 = vld [vmem:[%s195 + $0x20] sm:%s188]
                %206 = vst [vmem:[%s196 + $0x8] sm:%s188] %v205
                %v207 = vld [vmem:[%s195 + $0x28] sm:%s188]
                %208 = vst [vmem:[%s196 + $0xa] sm:%s188] %v207
                %v209 = vld [vmem:[%s195 + $0x30] sm:%s188]
                %210 = vst [vmem:[%s196 + $0xc] sm:%s188] %v209
                %v211 = vld [vmem:[%s195 + $0x38] sm:%s188]
                %212 = vst [vmem:[%s196 + $0xe] sm:%s188] %v211
              $region45: #{conv2d_resize_forward.1} parent=39 // loop_footer
                %s194 = sadd.s32 1, %s190
              $region46: #{conv2d_resize_forward.1} parent=39 // loop_footer_branch
                %189 = sbr.rel target = $region42
              $region47: #{conv2d_resize_forward.1} parent=39 // loop_exit
                _
            $region40: #{conv2d_resize_forward.1} parent=31 // pred_fallthru
              _
          $region32: #{conv2d_resize_forward.1} parent=27 // pred_fallthru
            _
          %249 = vnop
        $region28: #{conv2d_resize_forward.1} parent=23 // pred_fallthru
          _
      $region24: #{conv2d_resize_forward.1} parent=5 // pred_fallthru
        _
      %p250 = scmp.le.s32.totalorder 1, %s10
      %p251 = scmp.lt.s32.totalorder %s10, 5
      %p252 = pnand %p250, %p251
      %p253 = pneg %p252
      // Predicated region
      $region66: #{conv2d_resize_forward.1} parent=5 // pred_check
        _
      $region67: #{conv2d_resize_forward.1} parent=5 // pred_check_branch
        %255 = sbr.rel (%p252) target = $region69
      $region68: #{conv2d_resize_forward.1} parent=5 // pred_region
        %s256 = ssub.s32 %s10, 1
        %s257 = sand.u32 %s44, 1
        %s258 = sand.u32 %s44, 1
        %s259 = smul.addr %s258, 16
        %s260 = scalar_lea.vmem [#allocation3], %s259
        // Predicated region
        $region70: #{conv2d_resize_forward.1} parent=68 // pred_check
          %p261 = pneg %p57
        $region71: #{conv2d_resize_forward.1} parent=68 // pred_check_branch
          %263 = sbr.rel (%p261) target = $region73
        $region72: #{conv2d_resize_forward.1} parent=68 // pred_region
          _
        $region73: #{conv2d_resize_forward.1} parent=68 // pred_fallthru
          _
        %s264 = sand.u32 %s44, 1
        %s265 = sand.u32 %s44, 1
        %s266 = smul.addr %s265, 16
        %s267 = scalar_lea.vmem [#allocation3], %s266
        %p268 = pneg %p57
        %p269 = pneg %p54
        %p270 = scmp.lt.s32.totalorder %s21, 0
        %s271 = scalar_select %p270, %s21, 0
        %s272 = smul.addr %s271, 4
        %s273 = scalar_lea.vmem %s1, %s272
        %p274 = pneg %p83
        %p275 = pneg %p80
        %p276 = scmp.lt.s32.totalorder %s21, 0
        %s277 = scalar_select %p276, %s21, 0
        %s278 = scalar_lea.vmem %s2, %s277
        %p279 = pneg %p109
        %p280 = pneg %p106
        %p281 = pneg %p137
        %p282 = pneg %p134
        %s283 = smul.u32 8, %s20
        %p284 = scmp.lt.s32.totalorder %s21, 0
        %s285 = scalar_select %p284, %s21, 0
        %s286 = smul.addr %s285, 4
        %s287 = scalar_lea.vmem %s1, %s286
        %p288 = scmp.lt.s32.totalorder %s21, 0
        %s289 = scalar_select %p288, %s21, 0
        %s290 = scalar_lea.vmem %s2, %s289
        %s291 = smul.u32 4, %s20
        %p293 = scmp.eq.s32.totalorder %s22, 0
        // Predicated region
        $region74: #{conv2d_resize_forward.1} parent=68 // pred_check
          %p294 = pneg %p293
        $region75: #{conv2d_resize_forward.1} parent=68 // pred_check_branch
          %296 = sbr.rel (%p294) target = $region77
        $region76: #{conv2d_resize_forward.1} parent=68 // pred_region
          %v297 = vld [vmem:[%s290] sm:$0x1]
          %v299 = vlaneseq
          %v300 = vshrl.u32 %v299, 7
          %v301 = vsub.s32 0, %v300
          %v302 = vrot.slane %v297, %v301
          %304 = vst [vmem:[#allocation2] sm:$0xff] %v302
          %305 = vst [vmem:[#allocation2 + $0x8] sm:$0xff] %v302
          %306 = vst [vmem:[#allocation2 + $0x10] sm:$0xff] %v302
          %307 = vst [vmem:[#allocation2 + $0x18] sm:$0xff] %v302
        $region77: #{conv2d_resize_forward.1} parent=68 // pred_fallthru
          _
        %v308 = vld [vmem:[%s260] sm:$0x3]
        %v309 = vld [vmem:[%s260 + $0x2] sm:$0x3]
        %v310 = vld [vmem:[%s260 + $0x4] sm:$0x3]
        %v311 = vld [vmem:[%s260 + $0x6] sm:$0x3]
        %v312 = vld [vmem:[%s260 + $0x8] sm:$0x3]
        %v313 = vld [vmem:[%s260 + $0xa] sm:$0x3]
        %v314 = vld [vmem:[%s260 + $0xc] sm:$0x3]
        %v315 = vld [vmem:[%s260 + $0xe] sm:$0x3]
        %v316 = vld [vmem:[#allocation2] sm:$0xff]
        %v317 = vld [vmem:[#allocation2 + $0x8] sm:$0xff]
        %v318 = vld [vmem:[#allocation2 + $0x10] sm:$0xff]
        %v319 = vld [vmem:[#allocation2 + $0x18] sm:$0xff]
        %s320 = smul.u32 %s22, 2
        %s321 = smul.addr %s320, 4
        %s322 = scalar_lea.vmem %s287, %s321
        %v323 = vld [vmem:[%s322] sm:$0xf]
        %v324 = vld [vmem:[%s322 + $0x4] sm:$0xf]
        %v333 = vcombine.low %v308, %v309
        %v334 = vcombine.low %v310, %v311
        %v336 = vunpack.c.l.s4 1983009808
        %v337 = vunpack.c.0.s8 %v336
        %v338 = vlaneseq
        %v339 = vshrl.u32 %v338, 7
        %v340 = vsub.s32 %v337, %v339
        %v341 = vrot.slane %v333, %v340
        %v343 = vunpack.c.l.s4 1983009808
        %v344 = vunpack.c.0.s8 %v343
        %v345 = vlaneseq
        %v346 = vshrl.u32 %v345, 7
        %v347 = vsub.s32 %v344, %v346
        %v348 = vrot.slane %v334, %v347
        %v349 = vcombine.low %v341, %v348
        %v350 = vcombine.low %v312, %v313
        %v351 = vcombine.low %v314, %v315
        %v353 = vunpack.c.l.s4 1983009808
        %v354 = vunpack.c.0.s8 %v353
        %v355 = vlaneseq
        %v356 = vshrl.u32 %v355, 7
        %v357 = vsub.s32 %v354, %v356
        %v358 = vrot.slane %v350, %v357
        %v360 = vunpack.c.l.s4 1983009808
        %v361 = vunpack.c.0.s8 %v360
        %v362 = vlaneseq
        %v363 = vshrl.u32 %v362, 7
        %v364 = vsub.s32 %v361, %v363
        %v365 = vrot.slane %v351, %v364
        %v366 = vcombine.low %v358, %v365
        %v369 = vunpack.c.l.b16 %v323
        %v370 = vunpack.c.l.b16 %v324
        %v371 = vpack.c.b16 %v370, %v369
        %vm373 = vcmask 130048
        %v375 = vsel %vm373, %v349, 0
        %v378 = vsel %vm373, %v366, 0
        %380 = vmatprep.subr.bf16.mxu0 0
        %381 = vmatpush1.bf16.msra.mxu0 0
        %382 = vmatprep.subr.bf16.mxu0 0
        %383 = vmatpush1.bf16.msra.mxu0 0
        %384 = vmatprep.subr.bf16.mxu0 0
        %385 = vmatpush1.bf16.msra.mxu0 0
        %386 = vmatprep.subr.bf16.mxu0 0
        %387 = vmatpush1.bf16.msra.mxu0 0
        %388 = vmatprep.subr.bf16.mxu0 0
        %389 = vmatpush1.bf16.msra.mxu0 0
        %390 = vmatprep.subr.bf16.mxu0 0
        %391 = vmatpush1.bf16.msra.mxu0 0
        %392 = vmatprep.subr.bf16.mxu0 0
        %393 = vmatpush1.bf16.msra.mxu0 0
        %394 = vmatprep.subr.bf16.mxu0 0
        %395 = vmatpush1.bf16.msra.mxu0 %v371
        %396 = vmatprep.subr.bf16.mxu0 0
        %397 = vmatpush2.bf16.msra.mxu0 0
        %398 = vmatprep.subr.bf16.mxu0 0
        %399 = vmatpush2.bf16.msra.mxu0 0
        %400 = vmatprep.subr.bf16.mxu0 0
        %401 = vmatpush2.bf16.msra.mxu0 0
        %402 = vmatprep.subr.bf16.mxu0 0
        %403 = vmatpush2.bf16.msra.mxu0 0
        %404 = vmatprep.subr.bf16.mxu0 0
        %405 = vmatpush2.bf16.msra.mxu0 0
        %406 = vmatprep.subr.bf16.mxu0 0
        %407 = vmatpush2.bf16.msra.mxu0 0
        %408 = vmatprep.subr.bf16.mxu0 0
        %409 = vmatpush2.bf16.msra.mxu0 0
        %410 = vmatprep.subr.bf16.mxu0 0
        %411 = vmatpush2.bf16.msra.mxu0 0
        %412 = vmatprep.mubr.bf16.mxu0 0
        %413 = vmatmul.mubr.bf16.gmra.mxu0 %v375
        %v414 = vpop.f32.mrf.mxu0
        %v415 = vadd.f32 0.0, %v414
        %v416 = vpop.f32.mrf.mxu0
        %v417 = vpop.f32.mrf.mxu0
        %v418 = vadd.f32 0.0, %v417
        %v419 = vpop.f32.mrf.mxu0
        %420 = vmatprep.mubr.bf16.mxu0 0
        %421 = vmatmul.mubr.bf16.gmra.mxu0 %v378
        %v422 = vpop.f32.mrf.mxu0
        %v423 = vadd.f32 0.0, %v422
        %v424 = vpop.f32.mrf.mxu0
        %v425 = vpop.f32.mrf.mxu0
        %v426 = vadd.f32 0.0, %v425
        %v427 = vpop.f32.mrf.mxu0
        %428 = vdwg.mxu0
        %v429 = vadd.f32 %v316, %v415
        %v430 = vadd.f32 %v317, %v418
        %v431 = vadd.f32 %v318, %v423
        %v432 = vadd.f32 %v319, %v426
        %433 = vst [vmem:[#allocation2] sm:$0xff] %v429
        %434 = vst [vmem:[#allocation2 + $0x8] sm:$0xff] %v430
        %435 = vst [vmem:[#allocation2 + $0x10] sm:$0xff] %v431
        %436 = vst [vmem:[#allocation2 + $0x18] sm:$0xff] %v432
        %p437 = scmp.eq.s32.totalorder %s22, 3
        // Predicated region
        $region78: #{conv2d_resize_forward.1} parent=68 // pred_check
          %p438 = pneg %p437
        $region79: #{conv2d_resize_forward.1} parent=68 // pred_check_branch
          %440 = sbr.rel (%p438) target = $region81
        $region80: #{conv2d_resize_forward.1} parent=68 // pred_region
          %v441 = vld [vmem:[#allocation2] sm:$0xff]
          %v442 = vld [vmem:[#allocation2 + $0x8] sm:$0xff]
          %v443 = vld [vmem:[#allocation2 + $0x10] sm:$0xff]
          %v444 = vld [vmem:[#allocation2 + $0x18] sm:$0xff]
          %445 = vst [vmem:[#allocation4] sm:$0xff] %v441
          %446 = vst [vmem:[#allocation4 + $0x8] sm:$0xff] %v442
          %447 = vst [vmem:[#allocation4 + $0x10] sm:$0xff] %v443
          %448 = vst [vmem:[#allocation4 + $0x18] sm:$0xff] %v444
        $region81: #{conv2d_resize_forward.1} parent=68 // pred_fallthru
          _
        // Predicated region
        $region82: #{conv2d_resize_forward.1} parent=68 // pred_check
          %p449 = pneg %p134
        $region83: #{conv2d_resize_forward.1} parent=68 // pred_check_branch
          %451 = sbr.rel (%p449) target = $region85
        $region84: #{conv2d_resize_forward.1} parent=68 // pred_region
          %s452 = smul.u32 4, %s20
          %s454 = ssub.s32 512, 512
          %455 = vsyncadd [#allocation5], %s454
          %s456 = sadd.s32 %s21, %s452
          %s457 = smul.addr %s456, 128
          %s458 = scalar_lea.hbm %s3, %s457
          %s459 = sshll.u32 [#allocation4], 4
          %s460 = int_to_ptr.vmem [resolvable:$true] %s459
          %465 = dma.vmem_to_hbm [thread:$0]  %s460, 512, %s458, [#allocation5], 128, 128, 8
        $region85: #{conv2d_resize_forward.1} parent=68 // pred_fallthru
          _
        // Predicated region
        $region86: #{conv2d_resize_forward.1} parent=68 // pred_check
          %p466 = pneg %p134
        $region87: #{conv2d_resize_forward.1} parent=68 // pred_check_branch
          %468 = sbr.rel (%p466) target = $region89
        $region88: #{conv2d_resize_forward.1} parent=68 // pred_region
          %469 = dma.done [#allocation5], 512
        $region89: #{conv2d_resize_forward.1} parent=68 // pred_fallthru
          _
      $region69: #{conv2d_resize_forward.1} parent=5 // pred_fallthru
        _
      %p470 = scmp.le.s32.totalorder 2, %s10
      // Predicated region
      $region90: #{conv2d_resize_forward.1} parent=5 // pred_check
        %p471 = pneg %p470
      $region91: #{conv2d_resize_forward.1} parent=5 // pred_check_branch
        %473 = sbr.rel (%p471) target = $region93
      $region92: #{conv2d_resize_forward.1} parent=5 // pred_region
        %s474 = ssub.s32 %s10, 2
      $region93: #{conv2d_resize_forward.1} parent=5 // pred_fallthru
        _
    $region6: #{conv2d_resize_forward.1} parent=1 // loop_footer
      %s14 = sadd.s32 1, %s10
    $region7: #{conv2d_resize_forward.1} parent=1 // loop_footer_branch
      %9 = sbr.rel target = $region3
    $region8: #{conv2d_resize_forward.1} parent=1 // loop_exit
      _
    %475 = vsyncpa [#allocation5], 1
    %s476 = scalar_lea.sflag [#allocation5], 1
    %477 = vsyncpa %s476, 1

</llo_original>
